<compile_context>
chip_gen: v7x
topology: tpu7x:2x2x1
jax: 0.10.0
libtpu: 0.0.40
codegen_flags: <defaults>
</compile_context>

<pallas_src>
import functools

import jax
import jax.numpy as jnp
from jax import lax
from jax.experimental import pallas as pl
from jax.experimental.pallas import tpu as pltpu

LANE = 128
SUBLANE = 8


def _round_up(n, m):
    return ((n + m - 1) // m) * m


def _largest_divisor_at_most(n, cap):
    for d in range(max(1, min(n, cap)), 0, -1):
        if n % d == 0:
            return d
    return 1


def _flash_attention_kernel(q_ref, k_ref, v_ref, o_ref, m_sc, acc_sc, *,
                            out_cols, kv_len, mask_kv):
    """Online-softmax flash attention over pre-projected Q/K/V tiles.

    q_ref : (TB, TQ, Dp)   bf16, softmax scale already folded in
    k_ref : (TB, TK, Dp)   bf16
    v_ref : (TB, TK, Cp)   bf16, column `out_cols` is all-ones (denominator)
    o_ref : (TB, TQ, Cout)
    m_sc  : (TB, TQ, 1)    f32 running max
    acc_sc: (TB, TQ, Cp)   f32 running (unnormalized out | denominator | pad)
    """
    ki = pl.program_id(2)

    @pl.when(ki == 0)
    def _():
        m_sc[...] = jnp.full_like(m_sc, -jnp.inf)
        acc_sc[...] = jnp.zeros_like(acc_sc)

    # Scores: contract channel dims directly (no k transpose), f32 accumulation.
    s = lax.dot_general(q_ref[...], k_ref[...],
                        dimension_numbers=(((2,), (2,)), ((0,), (0,))),
                        preferred_element_type=jnp.float32)      # (TB, TQ, TK)

    if mask_kv:  # static: only traced when the kv axis was length-padded
        tk = k_ref.shape[1]
        col = lax.broadcasted_iota(jnp.int32, (1, 1, tk), 2)
        s = jnp.where(ki * tk + col < kv_len, s, -jnp.inf)

    # Online softmax update (all f32). The denominator rides along as the
    # extra all-ones V column, so no per-step cross-lane p.sum() is needed.
    m_prev = m_sc[...]
    m_new = jnp.maximum(m_prev, s.max(axis=-1, keepdims=True))
    alpha = jnp.exp(m_prev - m_new)
    p = jnp.exp(s - m_new)
    pv = lax.dot_general(p.astype(v_ref.dtype), v_ref[...],
                         dimension_numbers=(((2,), (1,)), ((0,), (0,))),
                         preferred_element_type=jnp.float32)     # (TB, TQ, Cp)
    acc_sc[...] = alpha * acc_sc[...] + pv
    m_sc[...] = m_new

    # Finalize on the last kv tile: ones-column of acc is the softmax denom.
    @pl.when(ki == pl.num_programs(2) - 1)
    def _():
        acc = acc_sc[...]
        denom = acc[:, :, out_cols:out_cols + 1]
        o_ref[...] = (acc[:, :, :out_cols] / denom).astype(o_ref.dtype)


def attention(x, wq, bq, wk, bk, wv, bv, *, matmul_dtype=jnp.bfloat16,
              q_tile=256, kv_tile=512):
    """x: (B, L, Cin); wq/wk: (Cin, Dqk); wv: (Cin, Cout); biases: (1, D)."""
    B, L, Cin = x.shape
    Dqk = wq.shape[1]
    Cout = wv.shape[1]
    out_dtype = x.dtype

    scale = 1.0 / (float(Dqk) ** 0.5)

    Dp = _round_up(Dqk, LANE)            # lane-dense Q/K channels
    Cp = _round_up(Cout + 1, LANE)       # +1 reserves the ones (denom) column

    # --- tile selection (decoupled from L divisibility via padding+masking) --
    TQ = min(_round_up(q_tile, SUBLANE), _round_up(L, SUBLANE))
    TK = min(_round_up(kv_tile, SUBLANE), _round_up(L, SUBLANE))
    TB = _largest_divisor_at_most(B, max(1, 128 // TQ))
    Lq = _round_up(L, TQ)
    Lk = _round_up(L, TK)

    # v7x shards the "parallel" grid axes over 2 TensorCores; keep >=2 steps
    # on those axes whenever the problem allows it.
    if (B // TB) * (Lq // TQ) == 1:
        if TB > 1:
            TB = _largest_divisor_at_most(B, TB - 1)
        elif TQ > SUBLANE:
            TQ = max(SUBLANE, _round_up(TQ // 2, SUBLANE))
            Lq = _round_up(L, TQ)

    # --- per-chip VMEM budget (v5e/v6e 128 MiB physical, v7x only 64 MiB) ----
    try:
        vmem_cap = pltpu.get_tpu_info().vmem_capacity_bytes
    except Exception:
        vmem_cap = 64 * 1024 * 1024      # v7x-safe fallback
    vmem_limit = min(int(0.75 * vmem_cap), 96 * 1024 * 1024)
    vmem_limit = max(vmem_limit, 32 * 1024 * 1024)

    def vmem_bytes(tb, tq, tk):
        mm = jnp.dtype(matmul_dtype).itemsize
        q_b = 2 * tb * tq * Dp * mm                      # double-buffered blocks
        k_b = 2 * tb * tk * Dp * mm
        v_b = 2 * tb * tk * Cp * mm
        o_b = 2 * tb * tq * Cout * jnp.dtype(out_dtype).itemsize
        sc = tb * tq * (Cp + 1) * 4                      # f32 scratch
        return q_b + k_b + v_b + o_b + sc

    while vmem_bytes(TB, TQ, TK) > int(0.8 * vmem_limit) and TK > SUBLANE:
        TK = max(SUBLANE, _round_up(TK // 2, SUBLANE))
    while vmem_bytes(TB, TQ, TK) > int(0.8 * vmem_limit) and TQ > SUBLANE:
        TQ = max(SUBLANE, _round_up(TQ // 2, SUBLANE))
    Lq = _round_up(L, TQ)
    Lk = _round_up(L, TK)

    # --- hoisted projections: one f32 matmul each over the whole sequence ----
    x32 = x.astype(jnp.float32)
    q = jnp.einsum("blc,cd->bld", x32, wq.astype(jnp.float32) * scale) \
        + bq.astype(jnp.float32) * scale
    k = jnp.einsum("blc,cd->bld", x32, wk.astype(jnp.float32)) \
        + bk.astype(jnp.float32)
    v = jnp.einsum("blc,cd->bld", x32, wv.astype(jnp.float32)) \
        + bv.astype(jnp.float32)

    # Ones column (denominator accumulator) inside the padded V channels.
    v = jnp.concatenate([v, jnp.ones((B, L, 1), jnp.float32)], axis=-1)

    q_p = jnp.pad(q, ((0, 0), (0, Lq - L), (0, Dp - Dqk))).astype(matmul_dtype)
    k_p = jnp.pad(k, ((0, 0), (0, Lk - L), (0, Dp - Dqk))).astype(matmul_dtype)
    v_p = jnp.pad(v, ((0, 0), (0, Lk - L),
                      (0, Cp - (Cout + 1)))).astype(matmul_dtype)

    grid = (B // TB, Lq // TQ, Lk // TK)

    kernel = functools.partial(_flash_attention_kernel,
                               out_cols=Cout, kv_len=L, mask_kv=(Lk != L))

    out = pl.pallas_call(
        kernel,
        out_shape=jax.ShapeDtypeStruct((B, Lq, Cout), out_dtype),
        grid_spec=pltpu.PrefetchScalarGridSpec(
            num_scalar_prefetch=0,
            grid=grid,
            in_specs=[
                pl.BlockSpec((TB, TQ, Dp), lambda b, qi, ki: (b, qi, 0)),
                pl.BlockSpec((TB, TK, Dp), lambda b, qi, ki: (b, ki, 0)),
                pl.BlockSpec((TB, TK, Cp), lambda b, qi, ki: (b, ki, 0)),
            ],
            out_specs=pl.BlockSpec((TB, TQ, Cout), lambda b, qi, ki: (b, qi, 0)),
            scratch_shapes=[
                pltpu.VMEM((TB, TQ, 1), jnp.float32),    # running max
                pltpu.VMEM((TB, TQ, Cp), jnp.float32),   # out accum + denom
            ],
        ),
        compiler_params=pltpu.CompilerParams(
            dimension_semantics=("parallel", "parallel", "arbitrary"),
            vmem_limit_bytes=vmem_limit,
        ),
    )(q_p, k_p, v_p)

    return out if Lq == L else out[:, :L, :]


def attention_ref(x, wq, bq, wk, bk, wv, bv):
    q = x @ wq + bq
    k = x @ wk + bk
    v = x @ wv + bv
    d = q.shape[-1]
    s = jnp.einsum("bld,bmd->blm", q, k) / jnp.sqrt(jnp.float32(d))
    p = jax.nn.softmax(s, axis=-1)
    return jnp.einsum("blm,bmc->blc", p, v)


if __name__ == "__main__":
    key = jax.random.PRNGKey(0)

    def make_inputs(k, B, L, Cin, Dqk, Cout):
        kx, kq, kbq, kk, kbk, kv, kbv = jax.random.split(k, 7)
        x = jax.random.normal(kx, (B, L, Cin), dtype=jnp.float32)
        # PyTorch Conv1d weights are (out, in, 1); stored here pre-transposed
        # as (in, out) for the matmul formulation. Deterministic synthetic init.
        wq = jax.random.normal(kq, (Cin, Dqk), dtype=jnp.float32) * 0.1
        bq = jax.random.normal(kbq, (1, Dqk), dtype=jnp.float32) * 0.1
        wk = jax.random.normal(kk, (Cin, Dqk), dtype=jnp.float32) * 0.1
        bk = jax.random.normal(kbk, (1, Dqk), dtype=jnp.float32) * 0.1
        wv = jax.random.normal(kv, (Cin, Cout), dtype=jnp.float32) * 0.1
        bv = jax.random.normal(kbv, (1, Cout), dtype=jnp.float32) * 0.1
        return x, wq, bq, wk, bk, wv, bv

    k1, k2, k3 = jax.random.split(key, 3)

    # Case 1: module-sized small shapes (single q/kv tile, grid split on batch).
    args1 = make_inputs(k1, 2, 8, 32, 16, 32)
    out1 = attention(*args1)
    jax.block_until_ready(out1)
    ref1 = attention_ref(*args1)
    assert out1.shape == (2, 8, 32)
    # bf16 MXU operands -> relaxed tolerance vs the f32 reference.
    assert jnp.allclose(out1, ref1, atol=2e-2, rtol=2e-2), \
        float(jnp.max(jnp.abs(out1 - ref1)))

    # Case 2: exercises the tiled online-softmax path (2 q-tiles x 2 kv-tiles).
    args2 = make_inputs(k2, 4, 16, 32, 16, 48)
    out2 = attention(*args2, q_tile=8, kv_tile=8)
    jax.block_until_ready(out2)
    ref2 = attention_ref(*args2)
    assert out2.shape == (4, 16, 48)
    assert jnp.allclose(out2, ref2, atol=2e-2, rtol=2e-2), \
        float(jnp.max(jnp.abs(out2 - ref2)))

    # Case 3: non-tile-divisible L -> sequence padding + in-kernel key masking.
    args3 = make_inputs(k3, 2, 12, 16, 8, 24)
    out3 = attention(*args3, q_tile=8, kv_tile=8)
    jax.block_until_ready(out3)
    ref3 = attention_ref(*args3)
    assert out3.shape == (2, 12, 24)
    assert jnp.allclose(out3, ref3, atol=2e-2, rtol=2e-2), \
        float(jnp.max(jnp.abs(out3 - ref3)))

    print("KERNEL_OK")
</pallas_src>

<mosaic_0001>
module attributes {stable_mosaic.version = 11 : i64} {
  func.func @_flash_attention_kernel(%arg0: i32, %arg1: i32, %arg2: i32, %arg3: memref<1x8x128xbf16, #tpu.memory_space<vmem>>, %arg4: memref<1x8x128xbf16, #tpu.memory_space<vmem>>, %arg5: memref<1x8x128xbf16, #tpu.memory_space<vmem>>, %arg6: memref<1x8x32xf32, #tpu.memory_space<vmem>>, %arg7: memref<1x8x1xf32, #tpu.memory_space<vmem>>, %arg8: memref<1x8x128xf32, #tpu.memory_space<vmem>>) attributes {dimension_semantics = [#tpu.dimension_semantics<parallel>, #tpu.dimension_semantics<parallel>, #tpu.dimension_semantics<arbitrary>], iteration_bounds = array<i64: 2, 1, 1>, scalar_prefetch = 0 : i64, scratch_operands = 2 : i64, tpu.core_type = #tpu.core_type<tc>, window_params = [{transform_indices = @transform_0, window_bounds = array<i64: 1, 8, 128>}, {transform_indices = @transform_1, window_bounds = array<i64: 1, 8, 128>}, {transform_indices = @transform_2, window_bounds = array<i64: 1, 8, 128>}, {transform_indices = @transform_3, window_bounds = array<i64: 1, 8, 32>}]} {
    %c0_i32 = arith.constant 0 : i32
    %0 = arith.cmpi eq, %arg2, %c0_i32 : i32
    %1 = arith.extui %0 : i1 to i32
    %c0_i32_0 = arith.constant 0 : i32
    %2 = arith.cmpi ne, %1, %c0_i32_0 : i32
    scf.if %2 {
      %cst_25 = arith.constant 0xFF800000 : f32
      %27 = vector.broadcast %cst_25 : f32 to vector<1x8x1xf32>
      %c0_26 = arith.constant 0 : index
      %c0_27 = arith.constant 0 : index
      %c0_28 = arith.constant 0 : index
      %28 = vector.load %arg7[%c0_26, %c0_27, %c0_28] : memref<1x8x1xf32, #tpu.memory_space<vmem>>, vector<1x8x1xf32>
      tpu.vector_store %arg7[%c0_26, %c0_27, %c0_28], %27 {strides = array<i32>} : memref<1x8x1xf32, #tpu.memory_space<vmem>>, vector<1x8x1xf32>,
      %cst_29 = arith.constant 0.000000e+00 : f32
      %29 = vector.broadcast %cst_29 : f32 to vector<1x8x128xf32>
      %c0_30 = arith.constant 0 : index
      %c0_31 = arith.constant 0 : index
      %c0_32 = arith.constant 0 : index
      %30 = vector.load %arg8[%c0_30, %c0_31, %c0_32] : memref<1x8x128xf32, #tpu.memory_space<vmem>>, vector<1x8x128xf32>
      tpu.vector_store %arg8[%c0_30, %c0_31, %c0_32], %29 {strides = array<i32>} : memref<1x8x128xf32, #tpu.memory_space<vmem>>, vector<1x8x128xf32>,
    } else {
    }
    %c0 = arith.constant 0 : index
    %c0_1 = arith.constant 0 : index
    %c0_2 = arith.constant 0 : index
    %3 = vector.load %arg3[%c0, %c0_1, %c0_2] : memref<1x8x128xbf16, #tpu.memory_space<vmem>>, vector<1x8x128xbf16>
    %c0_3 = arith.constant 0 : index
    %c0_4 = arith.constant 0 : index
    %c0_5 = arith.constant 0 : index
    %4 = vector.load %arg4[%c0_3, %c0_4, %c0_5] : memref<1x8x128xbf16, #tpu.memory_space<vmem>>, vector<1x8x128xbf16>
    %cst = arith.constant dense<0.000000e+00> : vector<1x8x8xf32>
    %5 = tpu.matmul %3, %4, %cst {dimension_numbers = #tpu.dot_dimension_numbers<[2], [2], [1], [1], [0, 0, 0, 1, 1, 1], [0], [0]>} : vector<1x8x128xbf16>, vector<1x8x128xbf16>, vector<1x8x8xf32> -> vector<1x8x8xf32>
    %c0_6 = arith.constant 0 : index
    %c0_7 = arith.constant 0 : index
    %c0_8 = arith.constant 0 : index
    %6 = vector.load %arg7[%c0_6, %c0_7, %c0_8] : memref<1x8x1xf32, #tpu.memory_space<vmem>>, vector<1x8x1xf32>
    %cst_9 = arith.constant dense<0xFF800000> : vector<1x8xf32>
    %7 = vector.multi_reduction <maximumf>, %5, %cst_9 [2] : vector<1x8x8xf32> to vector<1x8xf32>
    %8 = vector.shape_cast %7 : vector<1x8xf32> to vector<1x8x1xf32>
    %9 = arith.maximumf %6, %8 : vector<1x8x1xf32>
    %10 = arith.subf %6, %9 : vector<1x8x1xf32>
    %11 = math.exp %10 : vector<1x8x1xf32>
    %12 = vector.broadcast %9 : vector<1x8x1xf32> to vector<1x8x8xf32>
    %13 = arith.subf %5, %12 : vector<1x8x8xf32>
    %14 = math.exp %13 : vector<1x8x8xf32>
    %15 = arith.truncf %14 : vector<1x8x8xf32> to vector<1x8x8xbf16>
    %c0_10 = arith.constant 0 : index
    %c0_11 = arith.constant 0 : index
    %c0_12 = arith.constant 0 : index
    %16 = vector.load %arg5[%c0_10, %c0_11, %c0_12] : memref<1x8x128xbf16, #tpu.memory_space<vmem>>, vector<1x8x128xbf16>
    %cst_13 = arith.constant dense<0.000000e+00> : vector<1x8x128xf32>
    %17 = tpu.matmul %15, %16, %cst_13 {dimension_numbers = #tpu.dot_dimension_numbers<[2], [1], [1], [2], [0, 0, 0, 1, 1, 2], [0], [0]>} : vector<1x8x8xbf16>, vector<1x8x128xbf16>, vector<1x8x128xf32> -> vector<1x8x128xf32>
    %c0_14 = arith.constant 0 : index
    %c0_15 = arith.constant 0 : index
    %c0_16 = arith.constant 0 : index
    %18 = vector.load %arg8[%c0_14, %c0_15, %c0_16] : memref<1x8x128xf32, #tpu.memory_space<vmem>>, vector<1x8x128xf32>
    %19 = vector.broadcast %11 : vector<1x8x1xf32> to vector<1x8x128xf32>
    %20 = arith.mulf %19, %18 : vector<1x8x128xf32>
    %21 = arith.addf %20, %17 : vector<1x8x128xf32>
    %c0_17 = arith.constant 0 : index
    %c0_18 = arith.constant 0 : index
    %c0_19 = arith.constant 0 : index
    %22 = vector.load %arg8[%c0_17, %c0_18, %c0_19] : memref<1x8x128xf32, #tpu.memory_space<vmem>>, vector<1x8x128xf32>
    tpu.vector_store %arg8[%c0_17, %c0_18, %c0_19], %21 {strides = array<i32>} : memref<1x8x128xf32, #tpu.memory_space<vmem>>, vector<1x8x128xf32>,
    %c0_20 = arith.constant 0 : index
    %c0_21 = arith.constant 0 : index
    %c0_22 = arith.constant 0 : index
    %23 = vector.load %arg7[%c0_20, %c0_21, %c0_22] : memref<1x8x1xf32, #tpu.memory_space<vmem>>, vector<1x8x1xf32>
    tpu.vector_store %arg7[%c0_20, %c0_21, %c0_22], %9 {strides = array<i32>} : memref<1x8x1xf32, #tpu.memory_space<vmem>>, vector<1x8x1xf32>,
    %c0_i32_23 = arith.constant 0 : i32
    %24 = arith.cmpi eq, %arg2, %c0_i32_23 : i32
    %25 = arith.extui %24 : i1 to i32
    %c0_i32_24 = arith.constant 0 : i32
    %26 = arith.cmpi ne, %25, %c0_i32_24 : i32
    scf.if %26 {
      %c0_25 = arith.constant 0 : index
      %c0_26 = arith.constant 0 : index
      %c0_27 = arith.constant 0 : index
      %27 = vector.load %arg8[%c0_25, %c0_26, %c0_27] : memref<1x8x128xf32, #tpu.memory_space<vmem>>, vector<1x8x128xf32>
      %28 = vector.extract_strided_slice %27 {offsets = [0, 0, 32], sizes = [1, 8, 1], strides = [1, 1, 1]} : vector<1x8x128xf32> to vector<1x8x1xf32>
      %29 = vector.extract_strided_slice %27 {offsets = [0, 0, 0], sizes = [1, 8, 32], strides = [1, 1, 1]} : vector<1x8x128xf32> to vector<1x8x32xf32>
      %30 = vector.broadcast %28 : vector<1x8x1xf32> to vector<1x8x32xf32>
      %31 = arith.divf %29, %30 : vector<1x8x32xf32>
      %c0_28 = arith.constant 0 : index
      %c0_29 = arith.constant 0 : index
      %c0_30 = arith.constant 0 : index
      %32 = vector.load %arg6[%c0_28, %c0_29, %c0_30] : memref<1x8x32xf32, #tpu.memory_space<vmem>>, vector<1x8x32xf32>
      tpu.vector_store %arg6[%c0_28, %c0_29, %c0_30], %31 {strides = array<i32>} : memref<1x8x32xf32, #tpu.memory_space<vmem>>, vector<1x8x32xf32>,
    } else {
    }
    return
  }
  func.func @transform_0(%arg0: i32, %arg1: i32, %arg2: i32) -> (i32, i32, i32) {
    %c0_i32 = arith.constant 0 : i32
    %c0_i32_0 = arith.constant 0 : i32
    return %arg0, %arg1, %c0_i32 : i32, i32, i32
  }
  func.func @transform_1(%arg0: i32, %arg1: i32, %arg2: i32) -> (i32, i32, i32) {
    %c0_i32 = arith.constant 0 : i32
    %c0_i32_0 = arith.constant 0 : i32
    return %arg0, %arg2, %c0_i32 : i32, i32, i32
  }
  func.func @transform_2(%arg0: i32, %arg1: i32, %arg2: i32) -> (i32, i32, i32) {
    %c0_i32 = arith.constant 0 : i32
    %c0_i32_0 = arith.constant 0 : i32
    return %arg0, %arg2, %c0_i32 : i32, i32, i32
  }
  func.func @transform_3(%arg0: i32, %arg1: i32, %arg2: i32) -> (i32, i32, i32) {
    %c0_i32 = arith.constant 0 : i32
    %c0_i32_0 = arith.constant 0 : i32
    return %arg0, %arg1, %c0_i32 : i32, i32, i32
  }
}

</mosaic_0001>

<llo_original>
// kernel: tpu_custom_call.1
$region0: #{tpu_custom_call.1}
  #allocation0 [shape = 'u32[]', space=smem, size = 0x4, offset = 0x4, fixed_abs, tag = 'smem constant byte address 0x4 - core index']
  #allocation1 [shape = 'u32[144,128]{1,0:T(1,128)}', space=vmem, size = 0x12000, scoped, tag = 'internal scratch']
  #allocation2 [shape = 'f32[1,8,1]{2,1,0:T(8,128)}', space=vmem, size = 0x1000, scoped, tag = 'scratch operand']
  #allocation3 [shape = 'f32[1,8,128]{2,1,0:T(8,128)}', space=vmem, size = 0x1000, scoped, tag = 'scratch operand']
  %s0 = inlined_call_operand.hbm [shape: bf16[2,8,128], index: 0, kind: input, shape index: {}]
  %s1 = inlined_call_operand.hbm [shape: bf16[2,8,128], index: 1, kind: input, shape index: {}]
  %s2 = inlined_call_operand.hbm [shape: bf16[2,8,128], index: 2, kind: input, shape index: {}]
  %s3 = inlined_call_operand.hbm [shape: f32[2,8,32], index: 3, kind: output, shape index: {}]
  %s4 = sld [smem:[#allocation0]]
  $region65: #{tpu_custom_call.1} parent=0
    _
  %s6 = ssub.s32 1, %s4
  %s7 = scalar_select 0, %s6, %s4
  $region1: #{tpu_custom_call.1} parent=0
    #allocation4 [shape = 'u8[4096]{0}', space=vmem, size = 0x1000, scoped, tag = 'input window, operand 0']
    #allocation5 [shape = 's32[2]{0}', space=sflag, size = 0x8, scoped, tag = 'scoped memory for tpu_custom_call.1']
    #allocation6 [shape = 's32[2]{0}', space=sflag, size = 0x8, scoped, tag = 'scoped memory for tpu_custom_call.1']
    #allocation7 [shape = 'u8[4096]{0}', space=vmem, size = 0x1000, scoped, tag = 'input window, operand 1']
    #allocation8 [shape = 's32[2]{0}', space=sflag, size = 0x8, scoped, tag = 'scoped memory for tpu_custom_call.1']
    #allocation9 [shape = 'u8[4096]{0}', space=vmem, size = 0x1000, scoped, tag = 'input window, operand 2']
    #allocation10 [shape = 'u8[8192]{0}', space=vmem, size = 0x2000, scoped, tag = 'output window, operand 0']
    %8 = vsyncpa [#allocation5], 0
    %s9 = scalar_lea.sflag [#allocation5], 1
    %10 = vsyncpa %s9, 0
    %11 = vsyncpa [#allocation8], 0
    %s12 = scalar_lea.sflag [#allocation8], 1
    %13 = vsyncpa %s12, 0
    %14 = vsyncpa [#allocation6], 0
    %s15 = scalar_lea.sflag [#allocation6], 1
    %16 = vsyncpa %s15, 0
    loop: start=0, step=1, limit=4
    $region2: #{tpu_custom_call.1} parent=1 // loop_pre_header
      _
    $region3: #{tpu_custom_call.1} parent=1 // loop_header
      %s18 = sphi 0, %s22
      %p19 = scmp.ge.s32.totalorder %s18, 4
      %s25 = sphi 0, %s44
      %s26 = sphi 0, %s40
      %s27 = sphi 0, %s36
      %s28 = sphi 0, %s25
      %s29 = sphi 0, %s26
      %s30 = sphi 0, %s27
      %s31 = sphi 0, %s28
      %s32 = sphi 0, %s29
      %s33 = sphi 0, %s30
      %s49 = sphi 0, %s51
      %s52 = sphi 0, %s49
      %s53 = sphi 0, %s52
      %s69 = sphi 0, %s53
      %s77 = sphi 0, %s79
      %s80 = sphi 0, %s77
      %s81 = sphi 0, %s80
      %s97 = sphi 0, %s81
      %s105 = sphi 0, %s107
      %s108 = sphi 0, %s105
      %s109 = sphi 0, %s108
      %s125 = sphi 0, %s109
      %s133 = sphi 0, %s135
      %s136 = sphi 0, %s133
      %s137 = sphi 0, %s136
      %s153 = sphi 0, %s137
    $region4: #{tpu_custom_call.1} parent=1 // loop_header_branch
      %21 = sbr.rel (%p19) target = $region8
    $region5: #{tpu_custom_call.1} parent=1 // loop_body
      %s23 = ssub.s32 %s18, 1
      %s24 = ssub.s32 %s18, 2
      %s34 = sadd.s32 1, %s27
      %p35 = scmp.ge.s32.totalorder %s34, 1
      %s36 = scalar_select %p35, 0, %s34
      %s37 = sadd.s32 1, %s26
      %s38 = scalar_select %p35, %s37, %s26
      %p39 = scmp.ge.s32.totalorder %s38, 1
      %s40 = scalar_select %p39, 0, %s38
      %s41 = sadd.s32 1, %s25
      %s42 = scalar_select %p39, %s41, %s25
      %p43 = scmp.ge.s32.totalorder %s42, 2
      %s44 = scalar_select %p43, 0, %s42
      %s45 = ssub.s32 %s25, %s44
      %s46 = ssub.s32 %s26, %s40
      %s47 = sor.u32 %s45, %s46
      %p48 = scmp.eq.s32.totalorder %s47, 0
      %s50 = sadd.s32 %s49, 1
      %s51 = scalar_select %p48, %s49, %s50
      %p54 = pneg %p48
      %p55 = scmp.eq.s32.totalorder %s18, 1
      %p56 = por %p54, %p55
      %p57 = scmp.ne.s32.totalorder %s49, %s52
      %p58 = scmp.eq.s32.totalorder %s18, 0
      %p59 = por %p57, %p58
      %p60 = scmp.ne.s32.totalorder %s49, %s52
      %p61 = scmp.eq.s32.totalorder %s23, 1
      %p62 = por %p60, %p61
      %p63 = scmp.ne.s32.totalorder %s52, %s53
      %p64 = scmp.eq.s32.totalorder %s23, 0
      %p65 = por %p63, %p64
      %p66 = scmp.ne.s32.totalorder %s52, %s53
      %p67 = scmp.eq.s32.totalorder %s24, 1
      %p68 = por %p66, %p67
      %p70 = scmp.ne.s32.totalorder %s53, %s69
      %p71 = scmp.eq.s32.totalorder %s24, 0
      %p72 = por %p70, %p71
      %s73 = ssub.s32 %s25, %s44
      %s74 = ssub.s32 %s27, %s36
      %s75 = sor.u32 %s73, %s74
      %p76 = scmp.eq.s32.totalorder %s75, 0
      %s78 = sadd.s32 %s77, 1
      %s79 = scalar_select %p76, %s77, %s78
      %p82 = pneg %p76
      %p83 = scmp.eq.s32.totalorder %s18, 1
      %p84 = por %p82, %p83
      %p85 = scmp.ne.s32.totalorder %s77, %s80
      %p86 = scmp.eq.s32.totalorder %s18, 0
      %p87 = por %p85, %p86
      %p88 = scmp.ne.s32.totalorder %s77, %s80
      %p89 = scmp.eq.s32.totalorder %s23, 1
      %p90 = por %p88, %p89
      %p91 = scmp.ne.s32.totalorder %s80, %s81
      %p92 = scmp.eq.s32.totalorder %s23, 0
      %p93 = por %p91, %p92
      %p94 = scmp.ne.s32.totalorder %s80, %s81
      %p95 = scmp.eq.s32.totalorder %s24, 1
      %p96 = por %p94, %p95
      %p98 = scmp.ne.s32.totalorder %s81, %s97
      %p99 = scmp.eq.s32.totalorder %s24, 0
      %p100 = por %p98, %p99
      %s101 = ssub.s32 %s25, %s44
      %s102 = ssub.s32 %s27, %s36
      %s103 = sor.u32 %s101, %s102
      %p104 = scmp.eq.s32.totalorder %s103, 0
      %s106 = sadd.s32 %s105, 1
      %s107 = scalar_select %p104, %s105, %s106
      %p110 = pneg %p104
      %p111 = scmp.eq.s32.totalorder %s18, 1
      %p112 = por %p110, %p111
      %p113 = scmp.ne.s32.totalorder %s105, %s108
      %p114 = scmp.eq.s32.totalorder %s18, 0
      %p115 = por %p113, %p114
      %p116 = scmp.ne.s32.totalorder %s105, %s108
      %p117 = scmp.eq.s32.totalorder %s23, 1
      %p118 = por %p116, %p117
      %p119 = scmp.ne.s32.totalorder %s108, %s109
      %p120 = scmp.eq.s32.totalorder %s23, 0
      %p121 = por %p119, %p120
      %p122 = scmp.ne.s32.totalorder %s108, %s109
      %p123 = scmp.eq.s32.totalorder %s24, 1
      %p124 = por %p122, %p123
      %p126 = scmp.ne.s32.totalorder %s109, %s125
      %p127 = scmp.eq.s32.totalorder %s24, 0
      %p128 = por %p126, %p127
      %s129 = ssub.s32 %s25, %s44
      %s130 = ssub.s32 %s26, %s40
      %s131 = sor.u32 %s129, %s130
      %p132 = scmp.eq.s32.totalorder %s131, 0
      %s134 = sadd.s32 %s133, 1
      %s135 = scalar_select %p132, %s133, %s134
      %p138 = pneg %p132
      %p139 = scmp.eq.s32.totalorder %s18, 1
      %p140 = por %p138, %p139
      %p141 = scmp.ne.s32.totalorder %s133, %s136
      %p142 = scmp.eq.s32.totalorder %s18, 0
      %p143 = por %p141, %p142
      %p144 = scmp.ne.s32.totalorder %s133, %s136
      %p145 = scmp.eq.s32.totalorder %s23, 1
      %p146 = por %p144, %p145
      %p147 = scmp.ne.s32.totalorder %s136, %s137
      %p148 = scmp.eq.s32.totalorder %s23, 0
      %p149 = por %p147, %p148
      %p150 = scmp.ne.s32.totalorder %s136, %s137
      %p151 = scmp.eq.s32.totalorder %s24, 1
      %p152 = por %p150, %p151
      %p154 = scmp.ne.s32.totalorder %s137, %s153
      %p155 = scmp.eq.s32.totalorder %s24, 0
      %p156 = por %p154, %p155
      %p157 = scmp.le.s32.totalorder 1, %s18
      %p158 = scmp.lt.s32.totalorder %s18, 3
      %p159 = pnand %p157, %p158
      %p160 = pneg %p159
      // Predicated region
      $region9: #{tpu_custom_call.1} parent=5 // pred_check
        _
      $region10: #{tpu_custom_call.1} parent=5 // pred_check_branch
        %162 = sbr.rel (%p159) target = $region12
      $region11: #{tpu_custom_call.1} parent=5 // pred_region
        %s163 = ssub.s32 %s18, 1
      $region12: #{tpu_custom_call.1} parent=5 // pred_fallthru
        _
      %p164 = scmp.lt.s32.totalorder %s18, 2
      // Predicated region
      $region13: #{tpu_custom_call.1} parent=5 // pred_check
        %p165 = pneg %p164
      $region14: #{tpu_custom_call.1} parent=5 // pred_check_branch
        %167 = sbr.rel (%p165) target = $region16
      $region15: #{tpu_custom_call.1} parent=5 // pred_region
        // Predicated region
        $region17: #{tpu_custom_call.1} parent=15 // pred_check
          %p168 = pneg %p59
        $region18: #{tpu_custom_call.1} parent=15 // pred_check_branch
          %170 = sbr.rel (%p168) target = $region20
        $region19: #{tpu_custom_call.1} parent=15 // pred_region
          %s171 = sand.u32 %s49, 1
          %s172 = scalar_lea.sflag [#allocation5], %s171
          %s173 = sand.u32 %s49, 1
          %s174 = smul.addr %s173, 4
          %s175 = scalar_lea.vmem [#allocation4], %s174
          %s177 = ssub.s32 64, 64
          %178 = vsyncadd %s172, %s177
          %s179 = sadd.s32 %s26, %s25
          %s180 = smul.addr %s179, 64
          %s181 = scalar_lea.hbm %s0, %s180
          %s183 = sshll.u32 %s175, 4
          %s184 = int_to_ptr.vmem [resolvable:$true] %s183
          %186 = dma.hbm_to_vmem [thread:$0]  %s181, 64, %s184, %s172
        $region20: #{tpu_custom_call.1} parent=15 // pred_fallthru
          _
        // Predicated region
        $region21: #{tpu_custom_call.1} parent=15 // pred_check
          %p187 = pneg %p87
        $region22: #{tpu_custom_call.1} parent=15 // pred_check_branch
          %189 = sbr.rel (%p187) target = $region24
        $region23: #{tpu_custom_call.1} parent=15 // pred_region
          %s190 = sand.u32 %s18, 1
          %s191 = scalar_lea.sflag [#allocation8], %s190
          %s192 = sand.u32 %s77, 1
          %s193 = smul.addr %s192, 4
          %s194 = scalar_lea.vmem [#allocation7], %s193
          %s196 = ssub.s32 64, 64
          %197 = vsyncadd %s191, %s196
          %s198 = sadd.s32 %s27, %s25
          %s199 = smul.addr %s198, 64
          %s200 = scalar_lea.hbm %s1, %s199
          %s202 = sshll.u32 %s194, 4
          %s203 = int_to_ptr.vmem [resolvable:$true] %s202
          %205 = dma.hbm_to_vmem [thread:$0]  %s200, 64, %s203, %s191
        $region24: #{tpu_custom_call.1} parent=15 // pred_fallthru
          _
        // Predicated region
        $region25: #{tpu_custom_call.1} parent=15 // pred_check
          %p206 = pneg %p115
        $region26: #{tpu_custom_call.1} parent=15 // pred_check_branch
          %208 = sbr.rel (%p206) target = $region28
        $region27: #{tpu_custom_call.1} parent=15 // pred_region
          %s209 = sand.u32 %s18, 1
          %s210 = scalar_lea.sflag [#allocation8], %s209
          %s211 = sand.u32 %s105, 1
          %s212 = smul.addr %s211, 4
          %s213 = scalar_lea.vmem [#allocation9], %s212
          %s215 = ssub.s32 64, 64
          %216 = vsyncadd %s210, %s215
          %s217 = sadd.s32 %s27, %s25
          %s218 = smul.addr %s217, 64
          %s219 = scalar_lea.hbm %s2, %s218
          %s221 = sshll.u32 %s213, 4
          %s222 = int_to_ptr.vmem [resolvable:$true] %s221
          %224 = dma.hbm_to_vmem [thread:$0]  %s219, 64, %s222, %s210
        $region28: #{tpu_custom_call.1} parent=15 // pred_fallthru
          _
      $region16: #{tpu_custom_call.1} parent=5 // pred_fallthru
        _
      %p225 = scmp.le.s32.totalorder 1, %s18
      %p226 = scmp.lt.s32.totalorder %s18, 3
      %p227 = pnand %p225, %p226
      %p228 = pneg %p227
      // Predicated region
      $region29: #{tpu_custom_call.1} parent=5 // pred_check
        _
      $region30: #{tpu_custom_call.1} parent=5 // pred_check_branch
        %230 = sbr.rel (%p227) target = $region32
      $region31: #{tpu_custom_call.1} parent=5 // pred_region
        %s231 = ssub.s32 %s18, 1
        %s232 = sand.u32 %s52, 1
        %s233 = scalar_lea.sflag [#allocation5], %s232
        %s234 = sand.u32 %s52, 1
        %s235 = smul.addr %s234, 4
        %s236 = scalar_lea.vmem [#allocation4], %s235
        // Predicated region
        $region33: #{tpu_custom_call.1} parent=31 // pred_check
          %p237 = pneg %p65
        $region34: #{tpu_custom_call.1} parent=31 // pred_check_branch
          %239 = sbr.rel (%p237) target = $region36
        $region35: #{tpu_custom_call.1} parent=31 // pred_region
          %240 = dma.done %s233, 64
        $region36: #{tpu_custom_call.1} parent=31 // pred_fallthru
          _
        %s241 = sand.u32 %s23, 1
        %s242 = scalar_lea.sflag [#allocation8], %s241
        %s243 = sand.u32 %s80, 1
        %s244 = smul.addr %s243, 4
        %s245 = scalar_lea.vmem [#allocation7], %s244
        // Predicated region
        $region37: #{tpu_custom_call.1} parent=31 // pred_check
          %p246 = pneg %p93
        $region38: #{tpu_custom_call.1} parent=31 // pred_check_branch
          %248 = sbr.rel (%p246) target = $region40
        $region39: #{tpu_custom_call.1} parent=31 // pred_region
          %249 = dma.done %s242, 64
        $region40: #{tpu_custom_call.1} parent=31 // pred_fallthru
          _
        %s250 = sand.u32 %s23, 1
        %s251 = scalar_lea.sflag [#allocation8], %s250
        %s252 = sand.u32 %s108, 1
        %s253 = smul.addr %s252, 4
        %s254 = scalar_lea.vmem [#allocation9], %s253
        // Predicated region
        $region41: #{tpu_custom_call.1} parent=31 // pred_check
          %p255 = pneg %p121
        $region42: #{tpu_custom_call.1} parent=31 // pred_check_branch
          %257 = sbr.rel (%p255) target = $region44
        $region43: #{tpu_custom_call.1} parent=31 // pred_region
          %258 = dma.done %s251, 64
        $region44: #{tpu_custom_call.1} parent=31 // pred_fallthru
          _
        %s259 = sand.u32 %s52, 1
        %s260 = scalar_lea.sflag [#allocation5], %s259
        %s261 = sand.u32 %s52, 1
        %s262 = smul.addr %s261, 4
        %s263 = scalar_lea.vmem [#allocation4], %s262
        %p264 = pneg %p65
        %p265 = pneg %p62
        %s266 = sand.u32 %s23, 1
        %s267 = scalar_lea.sflag [#allocation8], %s266
        %s268 = sand.u32 %s80, 1
        %s269 = smul.addr %s268, 4
        %s270 = scalar_lea.vmem [#allocation7], %s269
        %p271 = pneg %p93
        %p272 = pneg %p90
        %s273 = sand.u32 %s23, 1
        %s274 = scalar_lea.sflag [#allocation8], %s273
        %s275 = sand.u32 %s108, 1
        %s276 = smul.addr %s275, 4
        %s277 = scalar_lea.vmem [#allocation9], %s276
        %p278 = pneg %p121
        %p279 = pneg %p118
        %p280 = pneg %p149
        %p281 = pneg %p146
        %s282 = sand.u32 %s136, 1
        %s283 = scalar_lea.sflag [#allocation6], %s282
        %s284 = sand.u32 %s136, 1
        %s285 = smul.addr %s284, 8
        %s286 = scalar_lea.vmem [#allocation10], %s285
        %p288 = scmp.eq.s32.totalorder %s30, 0
        // Predicated region
        $region45: #{tpu_custom_call.1} parent=31 // pred_check
          %p289 = pneg %p288
        $region46: #{tpu_custom_call.1} parent=31 // pred_check_branch
          %291 = sbr.rel (%p289) target = $region48
        $region47: #{tpu_custom_call.1} parent=31 // pred_region
          %vm292 = vcmask 7168
          %293 = vst.msk [vmem:[#allocation2] sm:$0xff] %vm292, -inf
          %294 = vst [vmem:[#allocation3] sm:$0xff] 0.0
        $region48: #{tpu_custom_call.1} parent=31 // pred_fallthru
          _
        %v295 = vld [vmem:[%s236] sm:$0xf]
        %v296 = vld [vmem:[%s245] sm:$0xf]
        %297 = vmatprep.subr.bf16.mxu0 0
        %298 = vmatpush1.bf16.xpose.msra.mxu0 %v296
        %299 = vmatprep.subr.bf16.mxu0 0
        %300 = vmatpush1.bf16.xpose.msra.mxu0 0
        %301 = vmatprep.subr.bf16.mxu0 0
        %302 = vmatpush1.bf16.xpose.msra.mxu0 0
        %303 = vmatprep.subr.bf16.mxu0 0
        %304 = vmatpush1.bf16.xpose.msra.mxu0 0
        %305 = vmatprep.subr.bf16.mxu0 0
        %306 = vmatpush1.bf16.xpose.msra.mxu0 0
        %307 = vmatprep.subr.bf16.mxu0 0
        %308 = vmatpush1.bf16.xpose.msra.mxu0 0
        %309 = vmatprep.subr.bf16.mxu0 0
        %310 = vmatpush1.bf16.xpose.msra.mxu0 0
        %311 = vmatprep.subr.bf16.mxu0 0
        %312 = vmatpush1.bf16.xpose.msra.mxu0 0
        %313 = vmatprep.subr.bf16.mxu0 0
        %314 = vmatpush1.bf16.xpose.msra.mxu0 0
        %315 = vmatprep.subr.bf16.mxu0 0
        %316 = vmatpush1.bf16.xpose.msra.mxu0 0
        %317 = vmatprep.subr.bf16.mxu0 0
        %318 = vmatpush1.bf16.xpose.msra.mxu0 0
        %319 = vmatprep.subr.bf16.mxu0 0
        %320 = vmatpush1.bf16.xpose.msra.mxu0 0
        %321 = vmatprep.subr.bf16.mxu0 0
        %322 = vmatpush1.bf16.xpose.msra.mxu0 0
        %323 = vmatprep.subr.bf16.mxu0 0
        %324 = vmatpush1.bf16.xpose.msra.mxu0 0
        %325 = vmatprep.subr.bf16.mxu0 0
        %326 = vmatpush1.bf16.xpose.msra.mxu0 0
        %327 = vmatprep.subr.bf16.mxu0 0
        %328 = vmatpush1.bf16.xpose.msra.mxu0 0
        %329 = vmatprep.mubr.bf16.mxu0 0
        %330 = vmatmul.mubr.bf16.gmra.mrb[0].mxu0 %v295
        %v331 = vpop.f32.mrb[0].mxu0
        %v332 = vadd.f32 0.0, %v331
        %v333 = vpop.f32.mrb[0].mxu0
        %v334 = vpop.f32.mrb[0].mxu0
        %v335 = vpop.f32.mrb[0].mxu0
        %336 = vdwg.mxu0
        %v337 = vld [vmem:[#allocation2] sm:$0xff]
        %vm338 = vcmask 64512
        %v339 = vsel %vm338, %v332, -inf
        %340 = vmax.xlane.f32.xlu0 %v339
        %v341 = vpop.xlane.xlu0 %340
        %v342 = vmax.f32 %v337, %v341
        %v343 = vsub.f32 %v337, %v342
        %v344 = vmul.f32 %v343, 1.442695
        %v345 = vpow.pop %v344
        %347 = vset.pattern.permute.xlu0 0
        %348 = vperm.xlu0 %347, %v342
        %v349 = vpop.permute.xlu0 %348
        %v351 = vsub.f32 %v332, %v349
        %v352 = vmul.f32 %v351, 1.442695
        %v353 = vpow.pop %v352
        %v354 = vpack.c.bf16 %v353, %v353
        %v355 = vld [vmem:[%s254] sm:$0xf]
        %v357 = vsel %vm338, %v354, 0
        %vm359 = vcmask 1043456
        %v361 = vsel %vm359, %v355, 0
        %363 = vmatprep.subr.bf16.mxu0 0
        %364 = vmatpush1.bf16.msra.mxu0 %v361
        %365 = vmatprep.subr.bf16.mxu0 0
        %366 = vmatpush1.bf16.msra.mxu0 0
        %367 = vmatprep.subr.bf16.mxu0 0
        %368 = vmatpush1.bf16.msra.mxu0 0
        %369 = vmatprep.subr.bf16.mxu0 0
        %370 = vmatpush1.bf16.msra.mxu0 0
        %371 = vmatprep.subr.bf16.mxu0 0
        %372 = vmatpush1.bf16.msra.mxu0 0
        %373 = vmatprep.subr.bf16.mxu0 0
        %374 = vmatpush1.bf16.msra.mxu0 0
        %375 = vmatprep.subr.bf16.mxu0 0
        %376 = vmatpush1.bf16.msra.mxu0 0
        %377 = vmatprep.subr.bf16.mxu0 0
        %378 = vmatpush1.bf16.msra.mxu0 0
        %379 = vmatprep.subr.bf16.mxu0 0
        %380 = vmatpush1.bf16.msra.mxu0 0
        %381 = vmatprep.subr.bf16.mxu0 0
        %382 = vmatpush1.bf16.msra.mxu0 0
        %383 = vmatprep.subr.bf16.mxu0 0
        %384 = vmatpush1.bf16.msra.mxu0 0
        %385 = vmatprep.subr.bf16.mxu0 0
        %386 = vmatpush1.bf16.msra.mxu0 0
        %387 = vmatprep.subr.bf16.mxu0 0
        %388 = vmatpush1.bf16.msra.mxu0 0
        %389 = vmatprep.subr.bf16.mxu0 0
        %390 = vmatpush1.bf16.msra.mxu0 0
        %391 = vmatprep.subr.bf16.mxu0 0
        %392 = vmatpush1.bf16.msra.mxu0 0
        %393 = vmatprep.subr.bf16.mxu0 0
        %394 = vmatpush1.bf16.msra.mxu0 0
        %395 = vmatprep.mubr.bf16.mxu0 0
        %396 = vmatmul.mubr.bf16.gmra.mrb[0].mxu0 %v357
        %v397 = vpop.f32.mrb[0].mxu0
        %v398 = vadd.f32 0.0, %v397
        %v399 = vpop.f32.mrb[0].mxu0
        %v400 = vpop.f32.mrb[0].mxu0
        %v401 = vpop.f32.mrb[0].mxu0
        %402 = vdwg.mxu0
        %v403 = vld [vmem:[#allocation3] sm:$0xff]
        %405 = vset.pattern.permute.xlu0 0
        %406 = vperm.xlu0 %405, %v345
        %v407 = vpop.permute.xlu0 %406
        %v409 = vmul.f32 %v407, %v403
        %v410 = vadd.f32 %v409, %v398
        %411 = vst [vmem:[#allocation3] sm:$0xff] %v410
        %vm412 = vcmask 7168
        %413 = vst.msk [vmem:[#allocation2] sm:$0xff] %vm412, %v342
        // Predicated region
        $region49: #{tpu_custom_call.1} parent=31 // pred_check
          %p414 = pneg %p288
        $region50: #{tpu_custom_call.1} parent=31 // pred_check_branch
          %416 = sbr.rel (%p414) target = $region52
        $region51: #{tpu_custom_call.1} parent=31 // pred_region
          %v417 = vld [vmem:[#allocation3] sm:$0xff]
          %419 = vset.pattern.permute.xlu0 32
          %420 = vperm.xlu0 %419, %v417
          %v421 = vpop.permute.xlu0 %420
          %v423 = vrcp.pop %v421
          %v424 = vmul.f32 %v417, %v423
          %vm425 = vcmask 261120
          %426 = vst.msk [vmem:[%s286] sm:$0xff] %vm425, %v424
        $region52: #{tpu_custom_call.1} parent=31 // pred_fallthru
          _
        %s427 = sand.u32 %s136, 1
        %s428 = scalar_lea.sflag [#allocation6], %s427
        %s429 = sand.u32 %s136, 1
        %s430 = smul.addr %s429, 8
        %s431 = scalar_lea.vmem [#allocation10], %s430
        // Predicated region
        $region53: #{tpu_custom_call.1} parent=31 // pred_check
          %p432 = pneg %p146
        $region54: #{tpu_custom_call.1} parent=31 // pred_check_branch
          %434 = sbr.rel (%p432) target = $region56
        $region55: #{tpu_custom_call.1} parent=31 // pred_region
          %s436 = ssub.s32 128, 128
          %437 = vsyncadd %s428, %s436
          %s438 = sadd.s32 %s29, %s28
          %s439 = smul.addr %s438, 128
          %s440 = scalar_lea.hbm %s3, %s439
          %s442 = sshll.u32 %s431, 4
          %s443 = int_to_ptr.vmem [resolvable:$true] %s442
          %445 = dma.vmem_to_hbm [thread:$0]  %s443, 128, %s440, %s428
        $region56: #{tpu_custom_call.1} parent=31 // pred_fallthru
          _
      $region32: #{tpu_custom_call.1} parent=5 // pred_fallthru
        _
      %p446 = scmp.le.s32.totalorder 2, %s18
      // Predicated region
      $region57: #{tpu_custom_call.1} parent=5 // pred_check
        %p447 = pneg %p446
      $region58: #{tpu_custom_call.1} parent=5 // pred_check_branch
        %449 = sbr.rel (%p447) target = $region60
      $region59: #{tpu_custom_call.1} parent=5 // pred_region
        %s450 = ssub.s32 %s18, 2
        // Predicated region
        $region61: #{tpu_custom_call.1} parent=59 // pred_check
          %p451 = pneg %p152
        $region62: #{tpu_custom_call.1} parent=59 // pred_check_branch
          %453 = sbr.rel (%p451) target = $region64
        $region63: #{tpu_custom_call.1} parent=59 // pred_region
          %s454 = sand.u32 %s137, 1
          %s455 = scalar_lea.sflag [#allocation6], %s454
          %s456 = sand.u32 %s137, 1
          %s457 = smul.addr %s456, 8
          %s458 = scalar_lea.vmem [#allocation10], %s457
          %459 = dma.done %s455, 128
        $region64: #{tpu_custom_call.1} parent=59 // pred_fallthru
          _
      $region60: #{tpu_custom_call.1} parent=5 // pred_fallthru
        _
    $region6: #{tpu_custom_call.1} parent=1 // loop_footer
      %s22 = sadd.s32 1, %s18
    $region7: #{tpu_custom_call.1} parent=1 // loop_footer_branch
      %17 = sbr.rel target = $region3
    $region8: #{tpu_custom_call.1} parent=1 // loop_exit
      _
    %460 = vsyncpa [#allocation5], 1
    %s461 = scalar_lea.sflag [#allocation5], 1
    %462 = vsyncpa %s461, 1
    %463 = vsyncpa [#allocation8], 1
    %s464 = scalar_lea.sflag [#allocation8], 1
    %465 = vsyncpa %s464, 1
    %466 = vsyncpa [#allocation6], 1
    %s467 = scalar_lea.sflag [#allocation6], 1
    %468 = vsyncpa %s467, 1

</llo_original>
